<compile_context>
chip_gen: v6e
topology: v6e:2x2x1
jax: 0.10.0
libtpu: 0.0.40
codegen_flags: <defaults>
</compile_context>

<pallas_src>
import jax
import jax.numpy as jnp
from jax.experimental import pallas as pl
from jax.experimental.pallas import tpu as pltpu


def _token_embedding_kernel(xp_ref, w_ref, o_ref):
    # xp_ref: (1, L+2, c_in)  circularly padded input, one batch element
    # w_ref : (3, c_in, TD)   conv taps, pre-transposed to (c_in, d_model) form
    # o_ref : (1, L, TD)
    L = o_ref.shape[1]
    acc = jnp.dot(xp_ref[0, pl.ds(0, L), :], w_ref[0],
                  preferred_element_type=jnp.float32)            # tap k=0 -> x[t-1]
    acc = acc + jnp.dot(xp_ref[0, pl.ds(1, L), :], w_ref[1],
                        preferred_element_type=jnp.float32)      # tap k=1 -> x[t]
    acc = acc + jnp.dot(xp_ref[0, pl.ds(2, L), :], w_ref[2],
                        preferred_element_type=jnp.float32)      # tap k=2 -> x[t+1]
    o_ref[0] = acc.astype(o_ref.dtype)


def token_embedding(x, weight, *, d_tile=None):
    """TokenEmbedding forward.

    x:      (B, L, c_in)
    weight: (d_model, c_in, 3)  -- nn.Conv1d weight layout (O, I, K)
    returns (B, L, d_model)
    """
    B, L, c_in = x.shape
    d_model, c_in_w, k = weight.shape
    assert c_in_w == c_in and k == 3, "expected Conv1d weight (d_model, c_in, 3)"

    # Lane-dense d_model tile: largest of {512, 256, 128} that divides d_model,
    # else fall back to the full d_model (allowed by the (8,128) rule).
    if d_tile is None:
        d_tile = d_model
        for cand in (512, 256, 128):
            if d_model % cand == 0:
                d_tile = cand
                break
    n_d = d_model // d_tile

    # Circular padding (one row on each side) done once in the wrapper; the
    # kernel then only needs static row-offset slices.
    x_pad = jnp.concatenate([x[:, -1:, :], x, x[:, :1, :]], axis=1)  # (B, L+2, c_in)

    # Reorganize conv weight (d_model, c_in, 3) -> (3, c_in, d_model): each tap
    # is a ready-to-use (c_in, d_model) matmul operand.
    w_taps = jnp.transpose(weight, (2, 1, 0))

    return pl.pallas_call(
        _token_embedding_kernel,
        out_shape=jax.ShapeDtypeStruct((B, L, d_model), x.dtype),
        grid_spec=pltpu.PrefetchScalarGridSpec(
            num_scalar_prefetch=0,
            grid=(B, n_d),
            in_specs=[
                pl.BlockSpec((1, L + 2, c_in), lambda b, j: (b, 0, 0)),
                pl.BlockSpec((3, c_in, d_tile), lambda b, j: (0, 0, j)),
            ],
            out_specs=pl.BlockSpec((1, L, d_tile), lambda b, j: (b, 0, j)),
        ),
        compiler_params=pltpu.CompilerParams(
            dimension_semantics=("parallel", "parallel"),
        ),
    )(x_pad, w_taps)
    # TODO(synk): for very long L (block (L, d_tile) f32 > a few MiB) also tile
    # L with a 1-row halo on each side (Element-offset index_map) instead of
    # keeping the full sequence per block.


if __name__ == "__main__":
    # Small, module-consistent shapes: batch=2, seq=16, c_in=4, d_model=128.
    B, L, c_in, d_model = 2, 16, 4, 128

    key = jax.random.PRNGKey(0)
    kx, kw = jax.random.split(key)
    x = jax.random.normal(kx, (B, L, c_in), dtype=jnp.float32)
    # Deterministic synthetic Conv1d weight: (out_channels, in_channels, kernel)
    weight = jax.random.normal(kw, (d_model, c_in, 3), dtype=jnp.float32) * 0.1

    out = jax.jit(token_embedding)(x, weight)
    out = jax.block_until_ready(out)

    # Reference: circular pad + VALID conv via lax (matches PyTorch Conv1d
    # with padding=1, padding_mode='circular', bias=False), then NCW -> NWC.
    x_ncw = jnp.transpose(x, (0, 2, 1))                          # (B, c_in, L)
    x_ncw_pad = jnp.concatenate(
        [x_ncw[:, :, -1:], x_ncw, x_ncw[:, :, :1]], axis=2)      # (B, c_in, L+2)
    ref_ncw = jax.lax.conv_general_dilated(
        x_ncw_pad, weight, window_strides=(1,), padding="VALID",
        dimension_numbers=("NCH", "OIH", "NCH"))                 # (B, d_model, L)
    ref = jnp.transpose(ref_ncw, (0, 2, 1))                      # (B, L, d_model)

    assert out.shape == (B, L, d_model)
    assert jnp.allclose(out, ref, atol=1e-4, rtol=1e-4), float(
        jnp.max(jnp.abs(out - ref)))

    print("KERNEL_OK")
</pallas_src>

<mosaic_0001>
module attributes {stable_mosaic.version = 11 : i64} {
  func.func @_token_embedding_kernel(%arg0: i32, %arg1: i32, %arg2: memref<1x18x4xf32, #tpu.memory_space<vmem>>, %arg3: memref<3x4x128xf32, #tpu.memory_space<vmem>>, %arg4: memref<1x16x128xf32, #tpu.memory_space<vmem>>) attributes {dimension_semantics = [#tpu.dimension_semantics<parallel>, #tpu.dimension_semantics<parallel>], iteration_bounds = array<i64: 2, 1>, scalar_prefetch = 0 : i64, scratch_operands = 0 : i64, tpu.core_type = #tpu.core_type<tc>, window_params = [{transform_indices = @transform_0, window_bounds = array<i64: 1, 18, 4>}, {transform_indices = @transform_1, window_bounds = array<i64: 3, 4, 128>}, {transform_indices = @transform_2, window_bounds = array<i64: 1, 16, 128>}]} {
    %c0 = arith.constant 0 : index
    %c0_0 = arith.constant 0 : index
    %c0_1 = arith.constant 0 : index
    %0 = vector.load %arg2[%c0, %c0_0, %c0_1] : memref<1x18x4xf32, #tpu.memory_space<vmem>>, vector<1x16x4xf32>
    %1 = vector.shape_cast %0 : vector<1x16x4xf32> to vector<16x4xf32>
    %c0_2 = arith.constant 0 : index
    %c0_3 = arith.constant 0 : index
    %c0_4 = arith.constant 0 : index
    %2 = vector.load %arg3[%c0_2, %c0_3, %c0_4] : memref<3x4x128xf32, #tpu.memory_space<vmem>>, vector<1x4x128xf32>
    %3 = vector.shape_cast %2 : vector<1x4x128xf32> to vector<4x128xf32>
    %cst = arith.constant dense<0.000000e+00> : vector<16x128xf32>
    %4 = tpu.matmul %1, %3, %cst {dimension_numbers = #tpu.dot_dimension_numbers<[1], [0], [0], [1], [0, 0, 1, 1], [], []>} : vector<16x4xf32>, vector<4x128xf32>, vector<16x128xf32> -> vector<16x128xf32>
    %c0_5 = arith.constant 0 : index
    %c1 = arith.constant 1 : index
    %c0_6 = arith.constant 0 : index
    %5 = vector.load %arg2[%c0_5, %c1, %c0_6] : memref<1x18x4xf32, #tpu.memory_space<vmem>>, vector<1x16x4xf32>
    %6 = vector.shape_cast %5 : vector<1x16x4xf32> to vector<16x4xf32>
    %c1_7 = arith.constant 1 : index
    %c0_8 = arith.constant 0 : index
    %c0_9 = arith.constant 0 : index
    %7 = vector.load %arg3[%c1_7, %c0_8, %c0_9] : memref<3x4x128xf32, #tpu.memory_space<vmem>>, vector<1x4x128xf32>
    %8 = vector.shape_cast %7 : vector<1x4x128xf32> to vector<4x128xf32>
    %cst_10 = arith.constant dense<0.000000e+00> : vector<16x128xf32>
    %9 = tpu.matmul %6, %8, %cst_10 {dimension_numbers = #tpu.dot_dimension_numbers<[1], [0], [0], [1], [0, 0, 1, 1], [], []>} : vector<16x4xf32>, vector<4x128xf32>, vector<16x128xf32> -> vector<16x128xf32>
    %10 = arith.addf %4, %9 : vector<16x128xf32>
    %c0_11 = arith.constant 0 : index
    %c2 = arith.constant 2 : index
    %c0_12 = arith.constant 0 : index
    %11 = vector.load %arg2[%c0_11, %c2, %c0_12] : memref<1x18x4xf32, #tpu.memory_space<vmem>>, vector<1x16x4xf32>
    %12 = vector.shape_cast %11 : vector<1x16x4xf32> to vector<16x4xf32>
    %c2_13 = arith.constant 2 : index
    %c0_14 = arith.constant 0 : index
    %c0_15 = arith.constant 0 : index
    %13 = vector.load %arg3[%c2_13, %c0_14, %c0_15] : memref<3x4x128xf32, #tpu.memory_space<vmem>>, vector<1x4x128xf32>
    %14 = vector.shape_cast %13 : vector<1x4x128xf32> to vector<4x128xf32>
    %cst_16 = arith.constant dense<0.000000e+00> : vector<16x128xf32>
    %15 = tpu.matmul %12, %14, %cst_16 {dimension_numbers = #tpu.dot_dimension_numbers<[1], [0], [0], [1], [0, 0, 1, 1], [], []>} : vector<16x4xf32>, vector<4x128xf32>, vector<16x128xf32> -> vector<16x128xf32>
    %16 = arith.addf %10, %15 : vector<16x128xf32>
    %c0_17 = arith.constant 0 : index
    %c0_18 = arith.constant 0 : index
    %c0_19 = arith.constant 0 : index
    %17 = vector.load %arg4[%c0_17, %c0_18, %c0_19] : memref<1x16x128xf32, #tpu.memory_space<vmem>>, vector<1x16x128xf32>
    %18 = vector.shape_cast %17 : vector<1x16x128xf32> to vector<16x128xf32>
    %19 = vector.shape_cast %16 : vector<16x128xf32> to vector<1x16x128xf32>
    tpu.vector_store %arg4[%c0_17, %c0_18, %c0_19], %19 {strides = array<i32>} : memref<1x16x128xf32, #tpu.memory_space<vmem>>, vector<1x16x128xf32>,
    return
  }
  func.func @transform_0(%arg0: i32, %arg1: i32) -> (i32, i32, i32) {
    %c0_i32 = arith.constant 0 : i32
    %c0_i32_0 = arith.constant 0 : i32
    %c0_i32_1 = arith.constant 0 : i32
    return %arg0, %c0_i32, %c0_i32_0 : i32, i32, i32
  }
  func.func @transform_1(%arg0: i32, %arg1: i32) -> (i32, i32, i32) {
    %c0_i32 = arith.constant 0 : i32
    %c0_i32_0 = arith.constant 0 : i32
    %c0_i32_1 = arith.constant 0 : i32
    return %c0_i32, %c0_i32_0, %arg1 : i32, i32, i32
  }
  func.func @transform_2(%arg0: i32, %arg1: i32) -> (i32, i32, i32) {
    %c0_i32 = arith.constant 0 : i32
    %c0_i32_0 = arith.constant 0 : i32
    return %arg0, %c0_i32, %arg1 : i32, i32, i32
  }
}

</mosaic_0001>

<llo_original>
// kernel: token_embedding.1
$region0: #{token_embedding.1}
  #allocation0 [shape = 'u32[]', space=smem, size = 0x4, offset = 0x4, fixed_abs, tag = 'smem constant byte address 0x4 - core index']
  #allocation1 [shape = 'u32[144,128]{1,0:T(1,128)}', space=vmem, size = 0x12000, scoped, tag = 'internal scratch']
  %s0 = inlined_call_operand.vmem [shape: f32[2,18,4], index: 0, kind: input, shape index: {}]
  %s1 = inlined_call_operand.vmem [shape: f32[3,4,128], index: 1, kind: input, shape index: {}]
  %s2 = inlined_call_operand.hbm [shape: f32[2,16,128], index: 2, kind: output, shape index: {}]
  %s3 = sld [smem:[#allocation0]]
  $region41: #{token_embedding.1} parent=0
    _
  %s5 = ssub.s32 1, %s3
  %s6 = scalar_select 0, %s5, %s3
  $region1: #{token_embedding.1} parent=0
    #allocation2 [shape = 'u8[16384]{0}', space=vmem, size = 0x4000, scoped, tag = 'output window, operand 0']
    #allocation3 [shape = 's32[2]{0}', space=sflag, size = 0x8, scoped, tag = 'scoped memory for token_embedding.1']
    %7 = vsyncpa [#allocation3], 0
    %s8 = scalar_lea.sflag [#allocation3], 1
    %9 = vsyncpa %s8, 0
    loop: start=0, step=1, limit=4
    $region2: #{token_embedding.1} parent=1 // loop_pre_header
      _
    $region3: #{token_embedding.1} parent=1 // loop_header
      %s11 = sphi 0, %s15
      %p12 = scmp.ge.s32.totalorder %s11, 4
      %s18 = sphi 0, %s30
      %s19 = sphi 0, %s26
      %s20 = sphi 0, %s18
      %s21 = sphi 0, %s19
      %s22 = sphi 0, %s20
      %s23 = sphi 0, %s21
      %s33 = sphi 0, %s35
      %s36 = sphi 0, %s33
      %s37 = sphi 0, %s36
      %s53 = sphi 0, %s37
      %s59 = sphi 0, %s61
      %s62 = sphi 0, %s59
      %s63 = sphi 0, %s62
      %s79 = sphi 0, %s63
      %s87 = sphi 0, %s89
      %s90 = sphi 0, %s87
      %s91 = sphi 0, %s90
      %s107 = sphi 0, %s91
    $region4: #{token_embedding.1} parent=1 // loop_header_branch
      %14 = sbr.rel (%p12) target = $region8
    $region5: #{token_embedding.1} parent=1 // loop_body
      %s16 = ssub.s32 %s11, 1
      %s17 = ssub.s32 %s11, 2
      %s24 = sadd.s32 1, %s19
      %p25 = scmp.ge.s32.totalorder %s24, 1
      %s26 = scalar_select %p25, 0, %s24
      %s27 = sadd.s32 1, %s18
      %s28 = scalar_select %p25, %s27, %s18
      %p29 = scmp.ge.s32.totalorder %s28, 2
      %s30 = scalar_select %p29, 0, %s28
      %s31 = ssub.s32 %s18, %s30
      %p32 = scmp.eq.s32.totalorder %s31, 0
      %s34 = sadd.s32 %s33, 1
      %s35 = scalar_select %p32, %s33, %s34
      %p38 = pneg %p32
      %p39 = scmp.eq.s32.totalorder %s11, 1
      %p40 = por %p38, %p39
      %p41 = scmp.ne.s32.totalorder %s33, %s36
      %p42 = scmp.eq.s32.totalorder %s11, 0
      %p43 = por %p41, %p42
      %p44 = scmp.ne.s32.totalorder %s33, %s36
      %p45 = scmp.eq.s32.totalorder %s16, 1
      %p46 = por %p44, %p45
      %p47 = scmp.ne.s32.totalorder %s36, %s37
      %p48 = scmp.eq.s32.totalorder %s16, 0
      %p49 = por %p47, %p48
      %p50 = scmp.ne.s32.totalorder %s36, %s37
      %p51 = scmp.eq.s32.totalorder %s17, 1
      %p52 = por %p50, %p51
      %p54 = scmp.ne.s32.totalorder %s37, %s53
      %p55 = scmp.eq.s32.totalorder %s17, 0
      %p56 = por %p54, %p55
      %s57 = ssub.s32 %s19, %s26
      %p58 = scmp.eq.s32.totalorder %s57, 0
      %s60 = sadd.s32 %s59, 1
      %s61 = scalar_select %p58, %s59, %s60
      %p64 = pneg %p58
      %p65 = scmp.eq.s32.totalorder %s11, 1
      %p66 = por %p64, %p65
      %p67 = scmp.ne.s32.totalorder %s59, %s62
      %p68 = scmp.eq.s32.totalorder %s11, 0
      %p69 = por %p67, %p68
      %p70 = scmp.ne.s32.totalorder %s59, %s62
      %p71 = scmp.eq.s32.totalorder %s16, 1
      %p72 = por %p70, %p71
      %p73 = scmp.ne.s32.totalorder %s62, %s63
      %p74 = scmp.eq.s32.totalorder %s16, 0
      %p75 = por %p73, %p74
      %p76 = scmp.ne.s32.totalorder %s62, %s63
      %p77 = scmp.eq.s32.totalorder %s17, 1
      %p78 = por %p76, %p77
      %p80 = scmp.ne.s32.totalorder %s63, %s79
      %p81 = scmp.eq.s32.totalorder %s17, 0
      %p82 = por %p80, %p81
      %s83 = ssub.s32 %s18, %s30
      %s84 = ssub.s32 %s19, %s26
      %s85 = sor.u32 %s83, %s84
      %p86 = scmp.eq.s32.totalorder %s85, 0
      %s88 = sadd.s32 %s87, 1
      %s89 = scalar_select %p86, %s87, %s88
      %p92 = pneg %p86
      %p93 = scmp.eq.s32.totalorder %s11, 1
      %p94 = por %p92, %p93
      %p95 = scmp.ne.s32.totalorder %s87, %s90
      %p96 = scmp.eq.s32.totalorder %s11, 0
      %p97 = por %p95, %p96
      %p98 = scmp.ne.s32.totalorder %s87, %s90
      %p99 = scmp.eq.s32.totalorder %s16, 1
      %p100 = por %p98, %p99
      %p101 = scmp.ne.s32.totalorder %s90, %s91
      %p102 = scmp.eq.s32.totalorder %s16, 0
      %p103 = por %p101, %p102
      %p104 = scmp.ne.s32.totalorder %s90, %s91
      %p105 = scmp.eq.s32.totalorder %s17, 1
      %p106 = por %p104, %p105
      %p108 = scmp.ne.s32.totalorder %s91, %s107
      %p109 = scmp.eq.s32.totalorder %s17, 0
      %p110 = por %p108, %p109
      %p111 = scmp.le.s32.totalorder 1, %s11
      %p112 = scmp.lt.s32.totalorder %s11, 3
      %p113 = pnand %p111, %p112
      %p114 = pneg %p113
      // Predicated region
      $region9: #{token_embedding.1} parent=5 // pred_check
        _
      $region10: #{token_embedding.1} parent=5 // pred_check_branch
        %116 = sbr.rel (%p113) target = $region12
      $region11: #{token_embedding.1} parent=5 // pred_region
        %s117 = ssub.s32 %s11, 1
        // Predicated region
        $region13: #{token_embedding.1} parent=11 // pred_check
          %p118 = pneg %p75
        $region14: #{token_embedding.1} parent=11 // pred_check_branch
          %120 = sbr.rel (%p118) target = $region16
        $region15: #{token_embedding.1} parent=11 // pred_region
          %p121 = scmp.lt.s32.totalorder %s21, 0
          %s122 = scalar_select %p121, %s21, 0
          %s123 = smul.addr %s122, 4
          %s124 = scalar_lea.vmem %s1, %s123
        $region16: #{token_embedding.1} parent=11 // pred_fallthru
          _
      $region12: #{token_embedding.1} parent=5 // pred_fallthru
        _
      %p125 = scmp.lt.s32.totalorder %s11, 2
      // Predicated region
      $region17: #{token_embedding.1} parent=5 // pred_check
        %p126 = pneg %p125
      $region18: #{token_embedding.1} parent=5 // pred_check_branch
        %128 = sbr.rel (%p126) target = $region20
      $region19: #{token_embedding.1} parent=5 // pred_region
        // Predicated region
        $region21: #{token_embedding.1} parent=19 // pred_check
          %p129 = pneg %p43
        $region22: #{token_embedding.1} parent=19 // pred_check_branch
          %131 = sbr.rel (%p129) target = $region24
        $region23: #{token_embedding.1} parent=19 // pred_region
          %p132 = scmp.lt.s32.totalorder %s18, 1
          %s133 = scalar_select %p132, %s18, 1
          %s134 = smul.addr %s133, 3
          %s135 = smul.addr %s134, 8
          %s136 = scalar_lea.vmem %s0, %s135
        $region24: #{token_embedding.1} parent=19 // pred_fallthru
          _
      $region20: #{token_embedding.1} parent=5 // pred_fallthru
        _
      %p137 = scmp.le.s32.totalorder 1, %s11
      %p138 = scmp.lt.s32.totalorder %s11, 3
      %p139 = pnand %p137, %p138
      %p140 = pneg %p139
      // Predicated region
      $region25: #{token_embedding.1} parent=5 // pred_check
        _
      $region26: #{token_embedding.1} parent=5 // pred_check_branch
        %142 = sbr.rel (%p139) target = $region28
      $region27: #{token_embedding.1} parent=5 // pred_region
        %s143 = ssub.s32 %s11, 1
        %p144 = scmp.lt.s32.totalorder %s20, 1
        %s145 = scalar_select %p144, %s20, 1
        %s146 = smul.addr %s145, 3
        %s147 = smul.addr %s146, 8
        %s148 = scalar_lea.vmem %s0, %s147
        %p149 = pneg %p49
        %p150 = pneg %p46
        %p151 = scmp.lt.s32.totalorder %s21, 0
        %s152 = scalar_select %p151, %s21, 0
        %s153 = smul.addr %s152, 4
        %s154 = scalar_lea.vmem %s1, %s153
        %p155 = pneg %p75
        %p156 = pneg %p72
        %p157 = pneg %p103
        %p158 = pneg %p100
        %s159 = sand.u32 %s90, 1
        %s160 = scalar_lea.sflag [#allocation3], %s159
        %s161 = sand.u32 %s90, 1
        %s162 = smul.addr %s161, 16
        %s163 = scalar_lea.vmem [#allocation2], %s162
        %p164 = scmp.lt.s32.totalorder %s20, 1
        %s165 = scalar_select %p164, %s20, 1
        %s166 = smul.addr %s165, 3
        %s167 = smul.addr %s166, 8
        %s168 = scalar_lea.vmem %s0, %s167
        %p169 = scmp.lt.s32.totalorder %s21, 0
        %s170 = scalar_select %p169, %s21, 0
        %s171 = smul.addr %s170, 4
        %s172 = scalar_lea.vmem %s1, %s171
        %v173 = vld [vmem:[%s168] sm:$0xff]
        %v174 = vld [vmem:[%s168 + $0x8] sm:$0xff]
        %v175 = vld [vmem:[%s172] sm:$0xf]
        %v176 = vld [vmem:[%s168 + $0x1] sm:$0xff]
        %v177 = vld [vmem:[%s168 + $0x9] sm:$0xff]
        %s178 = scalar_lea.vmem %s172, 4
        %v179 = vld [vmem:[%s178] sm:$0xf]
        %vm180 = vcmask 31744
        %v182 = vsel %vm180, %v176, 0
        %v185 = vsel %vm180, %v177, 0
        %vm187 = vcmask 1043456
        %v189 = vsel %vm187, %v179, 0
        %191 = vmatprep.subr.mxu0 0.0
        %192 = vmatpush1.msra.mxu0 0.0
        %193 = vmatprep.subr.mxu0 0.0
        %194 = vmatpush1.msra.mxu0 0.0
        %195 = vmatprep.subr.mxu0 0.0
        %196 = vmatpush1.msra.mxu0 0.0
        %197 = vmatprep.subr.mxu0 0.0
        %198 = vmatpush1.msra.mxu0 0.0
        %199 = vmatprep.subr.mxu0 0.0
        %200 = vmatpush1.msra.mxu0 0.0
        %201 = vmatprep.subr.mxu0 0.0
        %202 = vmatpush1.msra.mxu0 0.0
        %203 = vmatprep.subr.mxu0 0.0
        %204 = vmatpush1.msra.mxu0 0.0
        %205 = vmatprep.subr.mxu0 0.0
        %206 = vmatpush1.msra.mxu0 0.0
        %207 = vmatprep.subr.mxu0 0.0
        %208 = vmatpush1.msra.mxu0 0.0
        %209 = vmatprep.subr.mxu0 0.0
        %210 = vmatpush1.msra.mxu0 0.0
        %211 = vmatprep.subr.mxu0 0.0
        %212 = vmatpush1.msra.mxu0 0.0
        %213 = vmatprep.subr.mxu0 0.0
        %214 = vmatpush1.msra.mxu0 0.0
        %215 = vmatprep.subr.mxu0 0.0
        %216 = vmatpush1.msra.mxu0 0.0
        %217 = vmatprep.subr.mxu0 0.0
        %218 = vmatpush1.msra.mxu0 0.0
        %219 = vmatprep.subr.mxu0 0.0
        %220 = vmatpush1.msra.mxu0 0.0
        %221 = vmatprep.subr.mxu0 0.0
        %222 = vmatpush1.msra.mxu0 %v189
        %223 = vmatprep.subr.mxu0 0.0
        %224 = vmatpush2.msra.mxu0 0.0
        %225 = vmatprep.subr.mxu0 0.0
        %226 = vmatpush2.msra.mxu0 0.0
        %227 = vmatprep.subr.mxu0 0.0
        %228 = vmatpush2.msra.mxu0 0.0
        %229 = vmatprep.subr.mxu0 0.0
        %230 = vmatpush2.msra.mxu0 0.0
        %231 = vmatprep.subr.mxu0 0.0
        %232 = vmatpush2.msra.mxu0 0.0
        %233 = vmatprep.subr.mxu0 0.0
        %234 = vmatpush2.msra.mxu0 0.0
        %235 = vmatprep.subr.mxu0 0.0
        %236 = vmatpush2.msra.mxu0 0.0
        %237 = vmatprep.subr.mxu0 0.0
        %238 = vmatpush2.msra.mxu0 0.0
        %239 = vmatprep.subr.mxu0 0.0
        %240 = vmatpush2.msra.mxu0 0.0
        %241 = vmatprep.subr.mxu0 0.0
        %242 = vmatpush2.msra.mxu0 0.0
        %243 = vmatprep.subr.mxu0 0.0
        %244 = vmatpush2.msra.mxu0 0.0
        %245 = vmatprep.subr.mxu0 0.0
        %246 = vmatpush2.msra.mxu0 0.0
        %247 = vmatprep.subr.mxu0 0.0
        %248 = vmatpush2.msra.mxu0 0.0
        %249 = vmatprep.subr.mxu0 0.0
        %250 = vmatpush2.msra.mxu0 0.0
        %251 = vmatprep.subr.mxu0 0.0
        %252 = vmatpush2.msra.mxu0 0.0
        %253 = vmatprep.subr.mxu0 0.0
        %254 = vmatpush2.msra.mxu0 0.0
        %255 = vmatprep.mubr.f32.mxu0 0.0
        %256 = vmatmul.mubr.f32.gmra.mxu0 %v182
        %v257 = vpop.f32.mrf.mxu0
        %v258 = vadd.f32 0.0, %v257
        %v259 = vpop.f32.mrf.mxu0
        %260 = vmatprep.mubr.f32.mxu0 0.0
        %261 = vmatmul.mubr.f32.gmra.mxu0 %v185
        %v262 = vpop.f32.mrf.mxu0
        %v263 = vadd.f32 0.0, %v262
        %v264 = vpop.f32.mrf.mxu0
        %265 = vdwg.mxu0
        %v267 = vsel %vm180, %v173, 0
        %v270 = vsel %vm180, %v174, 0
        %v273 = vsel %vm187, %v175, 0
        %275 = vmatprep.subr.mxu0 0.0
        %276 = vmatpush1.msra.mxu0 0.0
        %277 = vmatprep.subr.mxu0 0.0
        %278 = vmatpush1.msra.mxu0 0.0
        %279 = vmatprep.subr.mxu0 0.0
        %280 = vmatpush1.msra.mxu0 0.0
        %281 = vmatprep.subr.mxu0 0.0
        %282 = vmatpush1.msra.mxu0 0.0
        %283 = vmatprep.subr.mxu0 0.0
        %284 = vmatpush1.msra.mxu0 0.0
        %285 = vmatprep.subr.mxu0 0.0
        %286 = vmatpush1.msra.mxu0 0.0
        %287 = vmatprep.subr.mxu0 0.0
        %288 = vmatpush1.msra.mxu0 0.0
        %289 = vmatprep.subr.mxu0 0.0
        %290 = vmatpush1.msra.mxu0 0.0
        %291 = vmatprep.subr.mxu0 0.0
        %292 = vmatpush1.msra.mxu0 0.0
        %293 = vmatprep.subr.mxu0 0.0
        %294 = vmatpush1.msra.mxu0 0.0
        %295 = vmatprep.subr.mxu0 0.0
        %296 = vmatpush1.msra.mxu0 0.0
        %297 = vmatprep.subr.mxu0 0.0
        %298 = vmatpush1.msra.mxu0 0.0
        %299 = vmatprep.subr.mxu0 0.0
        %300 = vmatpush1.msra.mxu0 0.0
        %301 = vmatprep.subr.mxu0 0.0
        %302 = vmatpush1.msra.mxu0 0.0
        %303 = vmatprep.subr.mxu0 0.0
        %304 = vmatpush1.msra.mxu0 0.0
        %305 = vmatprep.subr.mxu0 0.0
        %306 = vmatpush1.msra.mxu0 %v273
        %307 = vmatprep.subr.mxu0 0.0
        %308 = vmatpush2.msra.mxu0 0.0
        %309 = vmatprep.subr.mxu0 0.0
        %310 = vmatpush2.msra.mxu0 0.0
        %311 = vmatprep.subr.mxu0 0.0
        %312 = vmatpush2.msra.mxu0 0.0
        %313 = vmatprep.subr.mxu0 0.0
        %314 = vmatpush2.msra.mxu0 0.0
        %315 = vmatprep.subr.mxu0 0.0
        %316 = vmatpush2.msra.mxu0 0.0
        %317 = vmatprep.subr.mxu0 0.0
        %318 = vmatpush2.msra.mxu0 0.0
        %319 = vmatprep.subr.mxu0 0.0
        %320 = vmatpush2.msra.mxu0 0.0
        %321 = vmatprep.subr.mxu0 0.0
        %322 = vmatpush2.msra.mxu0 0.0
        %323 = vmatprep.subr.mxu0 0.0
        %324 = vmatpush2.msra.mxu0 0.0
        %325 = vmatprep.subr.mxu0 0.0
        %326 = vmatpush2.msra.mxu0 0.0
        %327 = vmatprep.subr.mxu0 0.0
        %328 = vmatpush2.msra.mxu0 0.0
        %329 = vmatprep.subr.mxu0 0.0
        %330 = vmatpush2.msra.mxu0 0.0
        %331 = vmatprep.subr.mxu0 0.0
        %332 = vmatpush2.msra.mxu0 0.0
        %333 = vmatprep.subr.mxu0 0.0
        %334 = vmatpush2.msra.mxu0 0.0
        %335 = vmatprep.subr.mxu0 0.0
        %336 = vmatpush2.msra.mxu0 0.0
        %337 = vmatprep.subr.mxu0 0.0
        %338 = vmatpush2.msra.mxu0 0.0
        %339 = vmatprep.mubr.f32.mxu0 0.0
        %340 = vmatmul.mubr.f32.gmra.mxu0 %v267
        %v341 = vpop.f32.mrf.mxu0
        %v342 = vadd.f32 %v258, %v341
        %v343 = vpop.f32.mrf.mxu0
        %344 = vmatprep.mubr.f32.mxu0 0.0
        %345 = vmatmul.mubr.f32.gmra.mxu0 %v270
        %v346 = vpop.f32.mrf.mxu0
        %v347 = vadd.f32 %v263, %v346
        %v348 = vpop.f32.mrf.mxu0
        %349 = vdwg.mxu0
        %v350 = vld [vmem:[%s168 + $0x2] sm:$0xff]
        %v351 = vld [vmem:[%s168 + $0xa] sm:$0xff]
        %s352 = scalar_lea.vmem %s172, 8
        %v353 = vld [vmem:[%s352] sm:$0xf]
        %v355 = vsel %vm180, %v350, 0
        %v358 = vsel %vm180, %v351, 0
        %v361 = vsel %vm187, %v353, 0
        %363 = vmatprep.subr.mxu0 0.0
        %364 = vmatpush1.msra.mxu0 0.0
        %365 = vmatprep.subr.mxu0 0.0
        %366 = vmatpush1.msra.mxu0 0.0
        %367 = vmatprep.subr.mxu0 0.0
        %368 = vmatpush1.msra.mxu0 0.0
        %369 = vmatprep.subr.mxu0 0.0
        %370 = vmatpush1.msra.mxu0 0.0
        %371 = vmatprep.subr.mxu0 0.0
        %372 = vmatpush1.msra.mxu0 0.0
        %373 = vmatprep.subr.mxu0 0.0
        %374 = vmatpush1.msra.mxu0 0.0
        %375 = vmatprep.subr.mxu0 0.0
        %376 = vmatpush1.msra.mxu0 0.0
        %377 = vmatprep.subr.mxu0 0.0
        %378 = vmatpush1.msra.mxu0 0.0
        %379 = vmatprep.subr.mxu0 0.0
        %380 = vmatpush1.msra.mxu0 0.0
        %381 = vmatprep.subr.mxu0 0.0
        %382 = vmatpush1.msra.mxu0 0.0
        %383 = vmatprep.subr.mxu0 0.0
        %384 = vmatpush1.msra.mxu0 0.0
        %385 = vmatprep.subr.mxu0 0.0
        %386 = vmatpush1.msra.mxu0 0.0
        %387 = vmatprep.subr.mxu0 0.0
        %388 = vmatpush1.msra.mxu0 0.0
        %389 = vmatprep.subr.mxu0 0.0
        %390 = vmatpush1.msra.mxu0 0.0
        %391 = vmatprep.subr.mxu0 0.0
        %392 = vmatpush1.msra.mxu0 0.0
        %393 = vmatprep.subr.mxu0 0.0
        %394 = vmatpush1.msra.mxu0 %v361
        %395 = vmatprep.subr.mxu0 0.0
        %396 = vmatpush2.msra.mxu0 0.0
        %397 = vmatprep.subr.mxu0 0.0
        %398 = vmatpush2.msra.mxu0 0.0
        %399 = vmatprep.subr.mxu0 0.0
        %400 = vmatpush2.msra.mxu0 0.0
        %401 = vmatprep.subr.mxu0 0.0
        %402 = vmatpush2.msra.mxu0 0.0
        %403 = vmatprep.subr.mxu0 0.0
        %404 = vmatpush2.msra.mxu0 0.0
        %405 = vmatprep.subr.mxu0 0.0
        %406 = vmatpush2.msra.mxu0 0.0
        %407 = vmatprep.subr.mxu0 0.0
        %408 = vmatpush2.msra.mxu0 0.0
        %409 = vmatprep.subr.mxu0 0.0
        %410 = vmatpush2.msra.mxu0 0.0
        %411 = vmatprep.subr.mxu0 0.0
        %412 = vmatpush2.msra.mxu0 0.0
        %413 = vmatprep.subr.mxu0 0.0
        %414 = vmatpush2.msra.mxu0 0.0
        %415 = vmatprep.subr.mxu0 0.0
        %416 = vmatpush2.msra.mxu0 0.0
        %417 = vmatprep.subr.mxu0 0.0
        %418 = vmatpush2.msra.mxu0 0.0
        %419 = vmatprep.subr.mxu0 0.0
        %420 = vmatpush2.msra.mxu0 0.0
        %421 = vmatprep.subr.mxu0 0.0
        %422 = vmatpush2.msra.mxu0 0.0
        %423 = vmatprep.subr.mxu0 0.0
        %424 = vmatpush2.msra.mxu0 0.0
        %425 = vmatprep.subr.mxu0 0.0
        %426 = vmatpush2.msra.mxu0 0.0
        %427 = vmatprep.mubr.f32.mxu0 0.0
        %428 = vmatmul.mubr.f32.gmra.mxu0 %v355
        %v429 = vpop.f32.mrf.mxu0
        %v430 = vadd.f32 0.0, %v429
        %v431 = vpop.f32.mrf.mxu0
        %432 = vmatprep.mubr.f32.mxu0 0.0
        %433 = vmatmul.mubr.f32.gmra.mxu0 %v358
        %v434 = vpop.f32.mrf.mxu0
        %v435 = vadd.f32 0.0, %v434
        %v436 = vpop.f32.mrf.mxu0
        %437 = vdwg.mxu0
        %v438 = vadd.f32 %v342, %v430
        %v439 = vadd.f32 %v347, %v435
        %440 = vst [vmem:[%s163] sm:$0xff] %v438
        %441 = vst [vmem:[%s163 + $0x8] sm:$0xff] %v439
        %s442 = sand.u32 %s90, 1
        %s443 = scalar_lea.sflag [#allocation3], %s442
        %s444 = sand.u32 %s90, 1
        %s445 = smul.addr %s444, 16
        %s446 = scalar_lea.vmem [#allocation2], %s445
        // Predicated region
        $region29: #{token_embedding.1} parent=27 // pred_check
          %p447 = pneg %p100
        $region30: #{token_embedding.1} parent=27 // pred_check_branch
          %449 = sbr.rel (%p447) target = $region32
        $region31: #{token_embedding.1} parent=27 // pred_region
          %s451 = ssub.s32 256, 256
          %452 = vsyncadd %s443, %s451
          %s453 = smul.addr %s20, 2
          %s454 = sadd.s32 %s21, %s453
          %s455 = smul.addr %s454, 128
          %s456 = scalar_lea.hbm %s2, %s455
          %s457 = sshll.u32 %s446, 4
          %s458 = int_to_ptr.vmem [resolvable:$true] %s457
          %463 = dma.vmem_to_hbm [thread:$0]  %s458, 256, %s456, %s443, 128, 128, 8
        $region32: #{token_embedding.1} parent=27 // pred_fallthru
          _
      $region28: #{token_embedding.1} parent=5 // pred_fallthru
        _
      %p464 = scmp.le.s32.totalorder 2, %s11
      // Predicated region
      $region33: #{token_embedding.1} parent=5 // pred_check
        %p465 = pneg %p464
      $region34: #{token_embedding.1} parent=5 // pred_check_branch
        %467 = sbr.rel (%p465) target = $region36
      $region35: #{token_embedding.1} parent=5 // pred_region
        %s468 = ssub.s32 %s11, 2
        // Predicated region
        $region37: #{token_embedding.1} parent=35 // pred_check
          %p469 = pneg %p106
        $region38: #{token_embedding.1} parent=35 // pred_check_branch
          %471 = sbr.rel (%p469) target = $region40
        $region39: #{token_embedding.1} parent=35 // pred_region
          %s472 = sand.u32 %s91, 1
          %s473 = scalar_lea.sflag [#allocation3], %s472
          %s474 = sand.u32 %s91, 1
          %s475 = smul.addr %s474, 16
          %s476 = scalar_lea.vmem [#allocation2], %s475
          %477 = dma.done %s473, 256
        $region40: #{token_embedding.1} parent=35 // pred_fallthru
          _
      $region36: #{token_embedding.1} parent=5 // pred_fallthru
        _
    $region6: #{token_embedding.1} parent=1 // loop_footer
      %s15 = sadd.s32 1, %s11
    $region7: #{token_embedding.1} parent=1 // loop_footer_branch
      %10 = sbr.rel target = $region3
    $region8: #{token_embedding.1} parent=1 // loop_exit
      _
    %478 = vsyncpa [#allocation3], 1
    %s479 = scalar_lea.sflag [#allocation3], 1
    %480 = vsyncpa %s479, 1

</llo_original>
